<compile_context>
chip_gen: v5e
topology: v5e:2x2
jax: 0.10.0
libtpu: 0.0.40
codegen_flags: <defaults>
</compile_context>

<pallas_src>
import jax
import jax.numpy as jnp
from jax import lax
from jax.experimental import pallas as pl
from jax.experimental.pallas import tpu as pltpu

EPS = 1e-7


def _round_up(x, m):
    return ((x + m - 1) // m) * m


def _make_paired_sum_kernel(channel_fns, row_tile, width, rows, steps, needs_mask):
    n_groups = row_tile // 8

    def kernel(x_ref, y_ref, out_ref, acc_ref):
        c = pl.program_id(0)
        i = pl.program_id(1)

        @pl.when(i == 0)
        def _init():
            acc_ref[...] = jnp.zeros_like(acc_ref)

        x = x_ref[...].astype(jnp.float32)
        y = y_ref[...].astype(jnp.float32)

        if needs_mask:
            # Mask rows whose *intended* global index is out of range.  This
            # zeroes (a) the undefined padding of the genuine partial tail
            # block and (b) entire duplicate blocks created by clamping the
            # index_map, so nothing is double-counted.  fn(0, 0) == 0 for all
            # channels, so masked rows contribute nothing.
            start = (c * steps + i) * row_tile
            row_ids = lax.broadcasted_iota(jnp.int32, (row_tile, 1), 0) + start
            valid = row_ids < rows
            x = jnp.where(valid, x, 0.0)
            y = jnp.where(valid, y, 0.0)

        # Fold the (row_tile, width) block into the (8, width) accumulator by
        # summing over aligned groups of 8 rows: pure vreg-wise VALU adds, no
        # cross-lane (XLU) reduction in the steady-state loop.
        for ci, fn in enumerate(channel_fns):
            v = fn(x, y).reshape(n_groups, 8, width)
            acc_ref[ci] += jnp.sum(v, axis=0)

        # Lane-dense store of the partial-sum slabs, once per chunk.
        @pl.when(i == steps - 1)
        def _store():
            out_ref[...] = acc_ref[...]

    return kernel


def _paired_partial_sums(x, y, channel_fns, *,
                         target_block_vmem_bytes=2 * 1024 * 1024):
    """Streams x, y (same shape) once from HBM; returns per-channel f32 sums.

    channel_fns: tuple of fn(x_f32, y_f32) -> elementwise array. Result[c] is
    sum(fn(x, y)) over all elements. Requires fn(0, 0) == 0 so masked rows
    contribute nothing.
    """
    assert x.shape == y.shape, (x.shape, y.shape)
    n_ch = len(channel_fns)
    width = x.shape[-1]
    x2 = x.reshape(-1, width)          # free (row-major view), no HBM copy
    y2 = y.reshape(-1, width)
    rows = x2.shape[0]

    itemsize = max(jnp.dtype(x.dtype).itemsize, jnp.dtype(y.dtype).itemsize)
    # Row tile: multiple of 8, sized so one input block occupies about
    # target_block_vmem_bytes of VMEM *after* lane padding (width -> 128k).
    width_pad = _round_up(width, 128)
    cap = max(8, (target_block_vmem_bytes // (width_pad * itemsize)) // 8 * 8)
    row_tile = min(_round_up(rows, 8), cap)

    blocks_total = -(-rows // row_tile)
    # Split the row stream into 2 chunks when there is enough work so v7x's two
    # TensorCores each stream ~half the rows (harmless outer loop on v5e/v6e).
    num_chunks = 2 if blocks_total >= 2 else 1
    steps = -(-blocks_total // num_chunks)
    # Masking is needed whenever the (num_chunks * steps) block visits cover
    # more rows than exist (ragged tail and/or clamped duplicate visits).
    needs_mask = (num_chunks * steps * row_tile) != rows
    last_block = blocks_total - 1

    kernel = _make_paired_sum_kernel(channel_fns, row_tile, width, rows, steps,
                                     needs_mask)

    def in_index(c, i):
        # Clamp so every DMA start is in bounds; over-visited blocks are fully
        # masked inside the kernel.
        return (jnp.minimum(c * steps + i, last_block), 0)

    partials = pl.pallas_call(
        kernel,
        out_shape=jax.ShapeDtypeStruct((num_chunks, n_ch, 8, width), jnp.float32),
        grid_spec=pltpu.PrefetchScalarGridSpec(
            num_scalar_prefetch=0,
            grid=(num_chunks, steps),
            in_specs=[
                pl.BlockSpec((row_tile, width), in_index),
                pl.BlockSpec((row_tile, width), in_index),
            ],
            out_specs=pl.BlockSpec((None, n_ch, 8, width),
                                   lambda c, i: (c, 0, 0, 0)),
            scratch_shapes=[pltpu.VMEM((n_ch, 8, width), jnp.float32)],
        ),
        compiler_params=pltpu.CompilerParams(
            dimension_semantics=("parallel", "arbitrary"),
        ),
    )(x2, y2)

    # Tiny final reduce of the per-chunk partial-sum slabs in plain JAX.
    return jnp.sum(partials, axis=(0, 2, 3))  # shape (n_ch,)


# Channel maps (all satisfy fn(0, 0) == 0, so masked rows are harmless).
_MEL_CHANNELS = (
    lambda x, y: jnp.abs(x - y),     # -> F.l1_loss numerator
    lambda x, y: jnp.square(x - y),  # -> F.mse_loss numerator
)

_STFT_CHANNELS = (
    lambda x, y: jnp.square(y - x),                              # ||y - x||_F^2
    lambda x, y: jnp.square(y),                                  # ||y||_F^2
    lambda x, y: jnp.abs(jnp.log(x + EPS) - jnp.log(y + EPS)),   # log-mag L1 num.
)


def mel_spectrogram_loss(pred_log_mel, target_log_mel, *,
                         target_block_vmem_bytes=2 * 1024 * 1024):
    """MelSpectrogramLoss.forward given the (log-)mel spectrograms."""
    sums = _paired_partial_sums(pred_log_mel, target_log_mel, _MEL_CHANNELS,
                                target_block_vmem_bytes=target_block_vmem_bytes)
    n = float(pred_log_mel.size)
    mel_l1 = sums[0] / n
    mel_l2 = sums[1] / n
    return mel_l1, mel_l2


def multi_resolution_stft_loss(pred_mags, target_mags, *,
                               target_block_vmem_bytes=2 * 1024 * 1024):
    """MultiResolutionSTFTLoss.forward given per-resolution STFT magnitudes."""
    total = jnp.float32(0.0)
    sc = jnp.float32(0.0)
    log_mag = jnp.float32(0.0)
    for x_mag, y_mag in zip(pred_mags, target_mags):
        sums = _paired_partial_sums(
            x_mag, y_mag, _STFT_CHANNELS,
            target_block_vmem_bytes=target_block_vmem_bytes)
        sc_i = jnp.sqrt(sums[0]) / (jnp.sqrt(sums[1]) + EPS)
        lm_i = sums[2] / float(x_mag.size)
        total = total + (sc_i + lm_i)
        sc = sc + sc_i
        log_mag = log_mag + lm_i
    n_res = float(len(pred_mags))
    return total / n_res, sc / n_res, log_mag / n_res


def ddsp_svs_loss(pred_log_mel, target_log_mel, pred_stft_mags, target_stft_mags,
                  *, use_mel_loss=True, use_stft_loss=True,
                  mel_weight=10.0, stft_weight=1.0,
                  target_block_vmem_bytes=2 * 1024 * 1024):
    """DDSPSVSLoss.forward on spectrogram-domain inputs."""
    # TODO(synk): torchaudio MelSpectrogram/AmplitudeToDB and torch.stft (FFT +
    # mel filterbank front-end) have no Pallas equivalent; this loss consumes
    # the spectrogram-domain tensors those transforms would produce.
    losses = {}
    total = jnp.float32(0.0)
    if use_mel_loss:
        mel_l1, mel_l2 = mel_spectrogram_loss(
            pred_log_mel, target_log_mel,
            target_block_vmem_bytes=target_block_vmem_bytes)
        losses["mel_l1"] = mel_l1
        losses["mel_l2"] = mel_l2
        total = total + mel_weight * (mel_l1 + mel_l2)
    if use_stft_loss:
        stft_total, stft_sc, stft_mag = multi_resolution_stft_loss(
            pred_stft_mags, target_stft_mags,
            target_block_vmem_bytes=target_block_vmem_bytes)
        losses["stft_total"] = stft_total
        losses["stft_sc"] = stft_sc
        losses["stft_mag"] = stft_mag
        total = total + stft_weight * stft_total
    losses["total"] = total
    return total, losses


def _ref_ddsp_svs_loss(pred_log_mel, target_log_mel, pred_mags, target_mags,
                       mel_weight=10.0, stft_weight=1.0):
    p = pred_log_mel.astype(jnp.float32)
    t = target_log_mel.astype(jnp.float32)
    d = p - t
    mel_l1 = jnp.mean(jnp.abs(d))
    mel_l2 = jnp.mean(jnp.square(d))
    sc = 0.0
    lm = 0.0
    tot = 0.0
    for x_mag, y_mag in zip(pred_mags, target_mags):
        x = x_mag.astype(jnp.float32)
        y = y_mag.astype(jnp.float32)
        sc_i = jnp.sqrt(jnp.sum(jnp.square(y - x))) / (jnp.sqrt(jnp.sum(jnp.square(y))) + EPS)
        lm_i = jnp.mean(jnp.abs(jnp.log(x + EPS) - jnp.log(y + EPS)))
        sc = sc + sc_i
        lm = lm + lm_i
        tot = tot + sc_i + lm_i
    n_res = len(pred_mags)
    stft_total = tot / n_res
    total = mel_weight * (mel_l1 + mel_l2) + stft_weight * stft_total
    return total, dict(mel_l1=mel_l1, mel_l2=mel_l2, stft_total=stft_total,
                       stft_sc=sc / n_res, stft_mag=lm / n_res, total=total)


if __name__ == "__main__":
    key = jax.random.PRNGKey(0)
    keys = jax.random.split(key, 8)

    batch = 2
    n_mels, mel_frames = 80, 17            # ~4096 samples / hop 256, center=True
    pred_log_mel = jax.random.normal(keys[0], (batch, n_mels, mel_frames), jnp.float32)
    target_log_mel = jax.random.normal(keys[1], (batch, n_mels, mel_frames), jnp.float32)

    fft_sizes = (512, 1024, 2048)
    hop_sizes = (128, 256, 512)
    n_samples = 4096
    pred_mags, target_mags = [], []
    for r, (n_fft, hop) in enumerate(zip(fft_sizes, hop_sizes)):
        shape = (batch, n_fft // 2 + 1, n_samples // hop + 1)
        pred_mags.append(jnp.abs(jax.random.normal(keys[2 + 2 * r], shape, jnp.float32)))
        target_mags.append(jnp.abs(jax.random.normal(keys[3 + 2 * r], shape, jnp.float32)))

    total, losses = ddsp_svs_loss(pred_log_mel, target_log_mel, pred_mags, target_mags)
    total = jax.block_until_ready(total)
    losses = jax.tree_util.tree_map(jax.block_until_ready, losses)

    ref_total, ref_losses = _ref_ddsp_svs_loss(pred_log_mel, target_log_mel,
                                               pred_mags, target_mags)
    for k in ("mel_l1", "mel_l2", "stft_total", "stft_sc", "stft_mag", "total"):
        assert jnp.allclose(losses[k], ref_losses[k], rtol=1e-4, atol=1e-5), (
            k, losses[k], ref_losses[k])
    assert jnp.allclose(total, ref_total, rtol=1e-4, atol=1e-5)

    # Exercise the multi-step / 2-chunk path with a tiny block budget (forces
    # row_tile < rows and exact divisibility -> no mask).
    l1_s, l2_s = mel_spectrogram_loss(pred_log_mel, target_log_mel,
                                      target_block_vmem_bytes=4096)
    jax.block_until_ready((l1_s, l2_s))
    assert jnp.allclose(l1_s, ref_losses["mel_l1"], rtol=1e-4, atol=1e-5)
    assert jnp.allclose(l2_s, ref_losses["mel_l2"], rtol=1e-4, atol=1e-5)

    # Exercise the ragged path: odd block count -> 2 chunks with one clamped
    # duplicate block visit + partial tail block, all handled by the in-kernel
    # row mask (no wrapper-side padding copies).
    l1_m, l2_m = mel_spectrogram_loss(pred_log_mel, target_log_mel,
                                      target_block_vmem_bytes=28672)
    jax.block_until_ready((l1_m, l2_m))
    assert jnp.allclose(l1_m, ref_losses["mel_l1"], rtol=1e-4, atol=1e-5)
    assert jnp.allclose(l2_m, ref_losses["mel_l2"], rtol=1e-4, atol=1e-5)

    # bf16 inputs stream as bf16 and are upcast to f32 inside the kernel.
    p_bf = pred_log_mel.astype(jnp.bfloat16)
    t_bf = target_log_mel.astype(jnp.bfloat16)
    l1_bf, l2_bf = mel_spectrogram_loss(p_bf, t_bf)
    jax.block_until_ready((l1_bf, l2_bf))
    d_bf = p_bf.astype(jnp.float32) - t_bf.astype(jnp.float32)
    assert jnp.allclose(l1_bf, jnp.mean(jnp.abs(d_bf)), rtol=1e-4, atol=1e-5)
    assert jnp.allclose(l2_bf, jnp.mean(jnp.square(d_bf)), rtol=1e-4, atol=1e-5)

    print("KERNEL_OK")
</pallas_src>

<mosaic_0001>
module attributes {stable_mosaic.version = 11 : i64} {
  func.func @kernel(%arg0: i32, %arg1: i32, %arg2: memref<160x17xf32, #tpu.memory_space<vmem>>, %arg3: memref<160x17xf32, #tpu.memory_space<vmem>>, %arg4: memref<1x2x8x17xf32, #tpu.memory_space<vmem>>, %arg5: memref<2x8x17xf32, #tpu.memory_space<vmem>>) attributes {dimension_semantics = [#tpu.dimension_semantics<parallel>, #tpu.dimension_semantics<arbitrary>], iteration_bounds = array<i64: 1, 1>, scalar_prefetch = 0 : i64, scratch_operands = 1 : i64, tpu.core_type = #tpu.core_type<tc>, window_params = [{transform_indices = @transform_0, window_bounds = array<i64: 160, 17>}, {transform_indices = @transform_1, window_bounds = array<i64: 160, 17>}, {transform_indices = @transform_2, window_bounds = array<i64: 1, 2, 8, 17>}]} {
    %c0_i32 = arith.constant 0 : i32
    %0 = arith.cmpi eq, %arg1, %c0_i32 : i32
    %1 = arith.extui %0 : i1 to i32
    %c0_i32_0 = arith.constant 0 : i32
    %2 = arith.cmpi ne, %1, %c0_i32_0 : i32
    scf.if %2 {
      %cst_18 = arith.constant 0.000000e+00 : f32
      %28 = vector.broadcast %cst_18 : f32 to vector<2x8x17xf32>
      %c0_19 = arith.constant 0 : index
      %c0_20 = arith.constant 0 : index
      %c0_21 = arith.constant 0 : index
      %29 = vector.load %arg5[%c0_19, %c0_20, %c0_21] : memref<2x8x17xf32, #tpu.memory_space<vmem>>, vector<2x8x17xf32>
      tpu.vector_store %arg5[%c0_19, %c0_20, %c0_21], %28 {strides = array<i32>} : memref<2x8x17xf32, #tpu.memory_space<vmem>>, vector<2x8x17xf32>,
    } else {
    }
    %c0 = arith.constant 0 : index
    %c0_1 = arith.constant 0 : index
    %3 = vector.load %arg2[%c0, %c0_1] : memref<160x17xf32, #tpu.memory_space<vmem>>, vector<160x17xf32>
    %c0_2 = arith.constant 0 : index
    %c0_3 = arith.constant 0 : index
    %4 = vector.load %arg3[%c0_2, %c0_3] : memref<160x17xf32, #tpu.memory_space<vmem>>, vector<160x17xf32>
    %5 = arith.subf %3, %4 : vector<160x17xf32>
    %6 = math.absf %5 : vector<160x17xf32>
    %7 = vector.shape_cast %6 : vector<160x17xf32> to vector<20x8x17xf32>
    %c0_4 = arith.constant 0 : index
    %c0_5 = arith.constant 0 : index
    %c0_6 = arith.constant 0 : index
    %8 = vector.load %arg5[%c0_4, %c0_5, %c0_6] : memref<2x8x17xf32, #tpu.memory_space<vmem>>, vector<1x8x17xf32>
    %9 = vector.shape_cast %8 : vector<1x8x17xf32> to vector<8x17xf32>
    %cst = arith.constant dense<0.000000e+00> : vector<8x17xf32>
    %10 = vector.multi_reduction <add>, %7, %cst [0] : vector<20x8x17xf32> to vector<8x17xf32>
    %11 = arith.addf %9, %10 : vector<8x17xf32>
    %c0_7 = arith.constant 0 : index
    %c0_8 = arith.constant 0 : index
    %c0_9 = arith.constant 0 : index
    %12 = vector.load %arg5[%c0_7, %c0_8, %c0_9] : memref<2x8x17xf32, #tpu.memory_space<vmem>>, vector<1x8x17xf32>
    %13 = vector.shape_cast %12 : vector<1x8x17xf32> to vector<8x17xf32>
    %14 = vector.shape_cast %11 : vector<8x17xf32> to vector<1x8x17xf32>
    tpu.vector_store %arg5[%c0_7, %c0_8, %c0_9], %14 {strides = array<i32>} : memref<2x8x17xf32, #tpu.memory_space<vmem>>, vector<1x8x17xf32>,
    %15 = arith.subf %3, %4 : vector<160x17xf32>
    %16 = arith.mulf %15, %15 : vector<160x17xf32>
    %17 = vector.shape_cast %16 : vector<160x17xf32> to vector<20x8x17xf32>
    %c1 = arith.constant 1 : index
    %c0_10 = arith.constant 0 : index
    %c0_11 = arith.constant 0 : index
    %18 = vector.load %arg5[%c1, %c0_10, %c0_11] : memref<2x8x17xf32, #tpu.memory_space<vmem>>, vector<1x8x17xf32>
    %19 = vector.shape_cast %18 : vector<1x8x17xf32> to vector<8x17xf32>
    %cst_12 = arith.constant dense<0.000000e+00> : vector<8x17xf32>
    %20 = vector.multi_reduction <add>, %17, %cst_12 [0] : vector<20x8x17xf32> to vector<8x17xf32>
    %21 = arith.addf %19, %20 : vector<8x17xf32>
    %c1_13 = arith.constant 1 : index
    %c0_14 = arith.constant 0 : index
    %c0_15 = arith.constant 0 : index
    %22 = vector.load %arg5[%c1_13, %c0_14, %c0_15] : memref<2x8x17xf32, #tpu.memory_space<vmem>>, vector<1x8x17xf32>
    %23 = vector.shape_cast %22 : vector<1x8x17xf32> to vector<8x17xf32>
    %24 = vector.shape_cast %21 : vector<8x17xf32> to vector<1x8x17xf32>
    tpu.vector_store %arg5[%c1_13, %c0_14, %c0_15], %24 {strides = array<i32>} : memref<2x8x17xf32, #tpu.memory_space<vmem>>, vector<1x8x17xf32>,
    %c0_i32_16 = arith.constant 0 : i32
    %25 = arith.cmpi eq, %arg1, %c0_i32_16 : i32
    %26 = arith.extui %25 : i1 to i32
    %c0_i32_17 = arith.constant 0 : i32
    %27 = arith.cmpi ne, %26, %c0_i32_17 : i32
    scf.if %27 {
      %c0_18 = arith.constant 0 : index
      %c0_19 = arith.constant 0 : index
      %c0_20 = arith.constant 0 : index
      %28 = vector.load %arg5[%c0_18, %c0_19, %c0_20] : memref<2x8x17xf32, #tpu.memory_space<vmem>>, vector<2x8x17xf32>
      %c0_21 = arith.constant 0 : index
      %c0_22 = arith.constant 0 : index
      %c0_23 = arith.constant 0 : index
      %c0_24 = arith.constant 0 : index
      %29 = vector.load %arg4[%c0_21, %c0_22, %c0_23, %c0_24] : memref<1x2x8x17xf32, #tpu.memory_space<vmem>>, vector<1x2x8x17xf32>
      %30 = vector.shape_cast %29 : vector<1x2x8x17xf32> to vector<2x8x17xf32>
      %31 = vector.shape_cast %28 : vector<2x8x17xf32> to vector<1x2x8x17xf32>
      tpu.vector_store %arg4[%c0_21, %c0_22, %c0_23, %c0_24], %31 {strides = array<i32>} : memref<1x2x8x17xf32, #tpu.memory_space<vmem>>, vector<1x2x8x17xf32>,
    } else {
    }
    return
  }
  func.func @transform_0(%arg0: i32, %arg1: i32) -> (i32, i32) {
    %c1_i32 = arith.constant 1 : i32
    %0 = arith.muli %arg0, %c1_i32 : i32
    %1 = arith.addi %0, %arg1 : i32
    %c0_i32 = arith.constant 0 : i32
    %2 = arith.minsi %1, %c0_i32 : i32
    %c0_i32_0 = arith.constant 0 : i32
    %c0_i32_1 = arith.constant 0 : i32
    return %2, %c0_i32_0 : i32, i32
  }
  func.func @transform_1(%arg0: i32, %arg1: i32) -> (i32, i32) {
    %c1_i32 = arith.constant 1 : i32
    %0 = arith.muli %arg0, %c1_i32 : i32
    %1 = arith.addi %0, %arg1 : i32
    %c0_i32 = arith.constant 0 : i32
    %2 = arith.minsi %1, %c0_i32 : i32
    %c0_i32_0 = arith.constant 0 : i32
    %c0_i32_1 = arith.constant 0 : i32
    return %2, %c0_i32_0 : i32, i32
  }
  func.func @transform_2(%arg0: i32, %arg1: i32) -> (i32, i32, i32, i32) {
    %c0_i32 = arith.constant 0 : i32
    %c0_i32_0 = arith.constant 0 : i32
    %c0_i32_1 = arith.constant 0 : i32
    %c0_i32_2 = arith.constant 0 : i32
    return %arg0, %c0_i32, %c0_i32_0, %c0_i32_1 : i32, i32, i32, i32
  }
}

</mosaic_0001>

<llo_original>
// kernel: tpu_custom_call.1
$region0: #{tpu_custom_call.1}
  #allocation0 [shape = 'u32[]', space=smem, size = 0x4, offset = 0x4, fixed_abs, tag = 'smem constant byte address 0x4 - core index']
  #allocation1 [shape = 'u32[72,128]{1,0:T(1,128)}', space=vmem, size = 0x9000, scoped, tag = 'internal scratch']
  #allocation2 [shape = 'f32[2,8,17]{2,1,0:T(8,128)}', space=vmem, size = 0x2000, scoped, tag = 'scratch operand']
  %s0 = inlined_call_operand.vmem [shape: f32[160,17], index: 0, kind: input, shape index: {}]
  %s1 = inlined_call_operand.vmem [shape: f32[160,17], index: 1, kind: input, shape index: {}]
  %s2 = inlined_call_operand.hbm [shape: f32[1,2,8,17], index: 2, kind: output, shape index: {}]
  %s3 = sld [smem:[#allocation0]]
  $region26: #{tpu_custom_call.1} parent=0
    _
  %s5 = ssub.s32 1, %s3
  %s6 = scalar_select 0, %s5, %s3
  $region1: #{tpu_custom_call.1} parent=0
    #allocation3 [shape = 'u8[8192]{0}', space=vmem, size = 0x2000, scoped, tag = 'output window, operand 0, single buffered']
    #allocation4 [shape = 's32[1]{0}', space=sflag, size = 0x4, scoped, tag = 'scoped memory for tpu_custom_call.1']
    %7 = vsyncpa [#allocation4], 0
    // Predicated region
    $region2: #{tpu_custom_call.1} parent=1 // pred_check
      _
    $region3: #{tpu_custom_call.1} parent=1 // pred_check_branch
      %9 = sbr.rel (0) target = $region5
    $region4: #{tpu_custom_call.1} parent=1 // pred_region
      %s10 = sadd.s32 0, 0
      %p11 = scmp.lt.s32.totalorder %s10, 0
      %s12 = scalar_select %p11, %s10, 0
      %s13 = smul.u32 20, %s12
      %p14 = scmp.lt.s32.totalorder %s13, 19
      %s15 = scalar_select %p14, %s13, 19
      %s16 = smul.addr %s15, 8
      %s17 = scalar_lea.vmem %s0, %s16
      %s18 = sadd.s32 0, 0
      %p19 = scmp.lt.s32.totalorder %s18, 0
      %s20 = scalar_select %p19, %s18, 0
      %s21 = smul.u32 20, %s20
    $region5: #{tpu_custom_call.1} parent=1 // pred_fallthru
      _
    // Predicated region
    $region6: #{tpu_custom_call.1} parent=1 // pred_check
      _
    $region7: #{tpu_custom_call.1} parent=1 // pred_check_branch
      %23 = sbr.rel (0) target = $region9
    $region8: #{tpu_custom_call.1} parent=1 // pred_region
      %s24 = sadd.s32 0, 0
      %p25 = scmp.lt.s32.totalorder %s24, 0
      %s26 = scalar_select %p25, %s24, 0
      %s27 = smul.u32 20, %s26
      %p28 = scmp.lt.s32.totalorder %s27, 19
      %s29 = scalar_select %p28, %s27, 19
      %s30 = smul.addr %s29, 8
      %s31 = scalar_lea.vmem %s1, %s30
      %s32 = sadd.s32 0, 0
      %p33 = scmp.lt.s32.totalorder %s32, 0
      %s34 = scalar_select %p33, %s32, 0
      %s35 = smul.u32 20, %s34
    $region9: #{tpu_custom_call.1} parent=1 // pred_fallthru
      _
    %s36 = sadd.s32 0, 0
    %p37 = scmp.lt.s32.totalorder %s36, 0
    %s38 = scalar_select %p37, %s36, 0
    %s39 = smul.u32 20, %s38
    %p40 = scmp.lt.s32.totalorder %s39, 19
    %s41 = scalar_select %p40, %s39, 19
    %s42 = smul.addr %s41, 8
    %s43 = scalar_lea.vmem %s0, %s42
    %s44 = sadd.s32 0, 0
    %p45 = scmp.lt.s32.totalorder %s44, 0
    %s46 = scalar_select %p45, %s44, 0
    %s47 = smul.u32 20, %s46
    %p48 = scmp.lt.s32.totalorder %s47, 19
    %s49 = scalar_select %p48, %s47, 19
    %s50 = smul.addr %s49, 8
    %s51 = scalar_lea.vmem %s1, %s50
    %s52 = sadd.s32 0, 0
    %p53 = scmp.lt.s32.totalorder %s52, 0
    %s54 = scalar_select %p53, %s52, 0
    %s55 = smul.u32 20, %s54
    %p56 = scmp.lt.s32.totalorder %s55, 19
    %s57 = scalar_select %p56, %s55, 19
    %s58 = smul.addr %s57, 8
    %s59 = scalar_lea.vmem %s0, %s58
    %s60 = sadd.s32 0, 0
    %p61 = scmp.lt.s32.totalorder %s60, 0
    %s62 = scalar_select %p61, %s60, 0
    %s63 = smul.u32 20, %s62
    %s64 = sadd.s32 0, 0
    %p65 = scmp.lt.s32.totalorder %s64, 0
    %s66 = scalar_select %p65, %s64, 0
    %s67 = smul.u32 20, %s66
    %p68 = scmp.lt.s32.totalorder %s67, 19
    %s69 = scalar_select %p68, %s67, 19
    %s70 = smul.addr %s69, 8
    %s71 = scalar_lea.vmem %s1, %s70
    %s72 = sadd.s32 0, 0
    %p73 = scmp.lt.s32.totalorder %s72, 0
    %s74 = scalar_select %p73, %s72, 0
    %s75 = smul.u32 20, %s74
    %p76 = scmp.eq.s32.totalorder 0, 0
    // Predicated region
    $region10: #{tpu_custom_call.1} parent=1 // pred_check
      %p77 = pneg %p76
    $region11: #{tpu_custom_call.1} parent=1 // pred_check_branch
      %79 = sbr.rel (%p77) target = $region13
    $region12: #{tpu_custom_call.1} parent=1 // pred_region
      %vm80 = vcmask 138240
      %81 = vst.msk [vmem:[#allocation2] sm:$0xff] %vm80, 0.0
      %82 = vst.msk [vmem:[#allocation2 + $0x8] sm:$0xff] %vm80, 0.0
    $region13: #{tpu_custom_call.1} parent=1 // pred_fallthru
      _
    %v83 = vld [vmem:[%s59] sm:$0xff]
    %v84 = vld [vmem:[%s59 + $0x8] sm:$0xff]
    %v85 = vld [vmem:[%s59 + $0x10] sm:$0xff]
    %v86 = vld [vmem:[%s59 + $0x18] sm:$0xff]
    %v87 = vld [vmem:[%s59 + $0x20] sm:$0xff]
    %v88 = vld [vmem:[%s59 + $0x28] sm:$0xff]
    %v89 = vld [vmem:[%s59 + $0x30] sm:$0xff]
    %v90 = vld [vmem:[%s59 + $0x38] sm:$0xff]
    %v91 = vld [vmem:[%s59 + $0x40] sm:$0xff]
    %v92 = vld [vmem:[%s59 + $0x48] sm:$0xff]
    %v93 = vld [vmem:[%s59 + $0x50] sm:$0xff]
    %v94 = vld [vmem:[%s59 + $0x58] sm:$0xff]
    %v95 = vld [vmem:[%s59 + $0x60] sm:$0xff]
    %v96 = vld [vmem:[%s59 + $0x68] sm:$0xff]
    %v97 = vld [vmem:[%s59 + $0x70] sm:$0xff]
    %v98 = vld [vmem:[%s59 + $0x78] sm:$0xff]
    %v99 = vld [vmem:[%s59 + $0x80] sm:$0xff]
    %v100 = vld [vmem:[%s59 + $0x88] sm:$0xff]
    %v101 = vld [vmem:[%s59 + $0x90] sm:$0xff]
    %v102 = vld [vmem:[%s59 + $0x98] sm:$0xff]
    %v103 = vld [vmem:[%s71] sm:$0xff]
    %v104 = vld [vmem:[%s71 + $0x8] sm:$0xff]
    %v105 = vld [vmem:[%s71 + $0x10] sm:$0xff]
    %v106 = vld [vmem:[%s71 + $0x18] sm:$0xff]
    %v107 = vld [vmem:[%s71 + $0x20] sm:$0xff]
    %v108 = vld [vmem:[%s71 + $0x28] sm:$0xff]
    %v109 = vld [vmem:[%s71 + $0x30] sm:$0xff]
    %v110 = vld [vmem:[%s71 + $0x38] sm:$0xff]
    %v111 = vld [vmem:[%s71 + $0x40] sm:$0xff]
    %v112 = vld [vmem:[%s71 + $0x48] sm:$0xff]
    %v113 = vld [vmem:[%s71 + $0x50] sm:$0xff]
    %v114 = vld [vmem:[%s71 + $0x58] sm:$0xff]
    %v115 = vld [vmem:[%s71 + $0x60] sm:$0xff]
    %v116 = vld [vmem:[%s71 + $0x68] sm:$0xff]
    %v117 = vld [vmem:[%s71 + $0x70] sm:$0xff]
    %v118 = vld [vmem:[%s71 + $0x78] sm:$0xff]
    %v119 = vld [vmem:[%s71 + $0x80] sm:$0xff]
    %v120 = vld [vmem:[%s71 + $0x88] sm:$0xff]
    %v121 = vld [vmem:[%s71 + $0x90] sm:$0xff]
    %v122 = vld [vmem:[%s71 + $0x98] sm:$0xff]
    %v123 = vsub.f32 %v83, %v103
    %v124 = vsub.f32 %v84, %v104
    %v125 = vsub.f32 %v85, %v105
    %v126 = vsub.f32 %v86, %v106
    %v127 = vsub.f32 %v87, %v107
    %v128 = vsub.f32 %v88, %v108
    %v129 = vsub.f32 %v89, %v109
    %v130 = vsub.f32 %v90, %v110
    %v131 = vsub.f32 %v91, %v111
    %v132 = vsub.f32 %v92, %v112
    %v133 = vsub.f32 %v93, %v113
    %v134 = vsub.f32 %v94, %v114
    %v135 = vsub.f32 %v95, %v115
    %v136 = vsub.f32 %v96, %v116
    %v137 = vsub.f32 %v97, %v117
    %v138 = vsub.f32 %v98, %v118
    %v139 = vsub.f32 %v99, %v119
    %v140 = vsub.f32 %v100, %v120
    %v141 = vsub.f32 %v101, %v121
    %v142 = vsub.f32 %v102, %v122
    %v143 = vand.u32 2147483647, %v123
    %v144 = vand.u32 2147483647, %v124
    %v145 = vand.u32 2147483647, %v125
    %v146 = vand.u32 2147483647, %v126
    %v147 = vand.u32 2147483647, %v127
    %v148 = vand.u32 2147483647, %v128
    %v149 = vand.u32 2147483647, %v129
    %v150 = vand.u32 2147483647, %v130
    %v151 = vand.u32 2147483647, %v131
    %v152 = vand.u32 2147483647, %v132
    %v153 = vand.u32 2147483647, %v133
    %v154 = vand.u32 2147483647, %v134
    %v155 = vand.u32 2147483647, %v135
    %v156 = vand.u32 2147483647, %v136
    %v157 = vand.u32 2147483647, %v137
    %v158 = vand.u32 2147483647, %v138
    %v159 = vand.u32 2147483647, %v139
    %v160 = vand.u32 2147483647, %v140
    %v161 = vand.u32 2147483647, %v141
    %v162 = vand.u32 2147483647, %v142
    %v163 = vld [vmem:[#allocation2] sm:$0xff]
    %vm164 = vcmask 138240
    %v165 = vsel %vm164, %v143, 0.0
    %v166 = vsel %vm164, %v144, 0.0
    %v167 = vadd.f32 %v165, %v166
    %v168 = vsel %vm164, %v145, 0.0
    %v169 = vadd.f32 %v167, %v168
    %v170 = vsel %vm164, %v146, 0.0
    %v171 = vadd.f32 %v169, %v170
    %v172 = vsel %vm164, %v147, 0.0
    %v173 = vadd.f32 %v171, %v172
    %v174 = vsel %vm164, %v148, 0.0
    %v175 = vadd.f32 %v173, %v174
    %v176 = vsel %vm164, %v149, 0.0
    %v177 = vadd.f32 %v175, %v176
    %v178 = vsel %vm164, %v150, 0.0
    %v179 = vadd.f32 %v177, %v178
    %v180 = vsel %vm164, %v151, 0.0
    %v181 = vadd.f32 %v179, %v180
    %v182 = vsel %vm164, %v152, 0.0
    %v183 = vadd.f32 %v181, %v182
    %v184 = vsel %vm164, %v153, 0.0
    %v185 = vadd.f32 %v183, %v184
    %v186 = vsel %vm164, %v154, 0.0
    %v187 = vadd.f32 %v185, %v186
    %v188 = vsel %vm164, %v155, 0.0
    %v189 = vadd.f32 %v187, %v188
    %v190 = vsel %vm164, %v156, 0.0
    %v191 = vadd.f32 %v189, %v190
    %v192 = vsel %vm164, %v157, 0.0
    %v193 = vadd.f32 %v191, %v192
    %v194 = vsel %vm164, %v158, 0.0
    %v195 = vadd.f32 %v193, %v194
    %v196 = vsel %vm164, %v159, 0.0
    %v197 = vadd.f32 %v195, %v196
    %v198 = vsel %vm164, %v160, 0.0
    %v199 = vadd.f32 %v197, %v198
    %v200 = vsel %vm164, %v161, 0.0
    %v201 = vadd.f32 %v199, %v200
    %v202 = vsel %vm164, %v162, 0.0
    %v203 = vadd.f32 %v201, %v202
    %v204 = vadd.f32 %v163, %v203
    %205 = vst.msk [vmem:[#allocation2] sm:$0xff] %vm164, %v204
    %v206 = vmul.f32 %v123, %v123
    %v207 = vmul.f32 %v124, %v124
    %v208 = vmul.f32 %v125, %v125
    %v209 = vmul.f32 %v126, %v126
    %v210 = vmul.f32 %v127, %v127
    %v211 = vmul.f32 %v128, %v128
    %v212 = vmul.f32 %v129, %v129
    %v213 = vmul.f32 %v130, %v130
    %v214 = vmul.f32 %v131, %v131
    %v215 = vmul.f32 %v132, %v132
    %v216 = vmul.f32 %v133, %v133
    %v217 = vmul.f32 %v134, %v134
    %v218 = vmul.f32 %v135, %v135
    %v219 = vmul.f32 %v136, %v136
    %v220 = vmul.f32 %v137, %v137
    %v221 = vmul.f32 %v138, %v138
    %v222 = vmul.f32 %v139, %v139
    %v223 = vmul.f32 %v140, %v140
    %v224 = vmul.f32 %v141, %v141
    %v225 = vmul.f32 %v142, %v142
    %s226 = scalar_lea.vmem [#allocation2], 8
    %v227 = vld [vmem:[%s226] sm:$0xff]
    %v228 = vsel %vm164, %v206, 0.0
    %v229 = vsel %vm164, %v207, 0.0
    %v230 = vadd.f32 %v228, %v229
    %v231 = vsel %vm164, %v208, 0.0
    %v232 = vadd.f32 %v230, %v231
    %v233 = vsel %vm164, %v209, 0.0
    %v234 = vadd.f32 %v232, %v233
    %v235 = vsel %vm164, %v210, 0.0
    %v236 = vadd.f32 %v234, %v235
    %v237 = vsel %vm164, %v211, 0.0
    %v238 = vadd.f32 %v236, %v237
    %v239 = vsel %vm164, %v212, 0.0
    %v240 = vadd.f32 %v238, %v239
    %v241 = vsel %vm164, %v213, 0.0
    %v242 = vadd.f32 %v240, %v241
    %v243 = vsel %vm164, %v214, 0.0
    %v244 = vadd.f32 %v242, %v243
    %v245 = vsel %vm164, %v215, 0.0
    %v246 = vadd.f32 %v244, %v245
    %v247 = vsel %vm164, %v216, 0.0
    %v248 = vadd.f32 %v246, %v247
    %v249 = vsel %vm164, %v217, 0.0
    %v250 = vadd.f32 %v248, %v249
    %v251 = vsel %vm164, %v218, 0.0
    %v252 = vadd.f32 %v250, %v251
    %v253 = vsel %vm164, %v219, 0.0
    %v254 = vadd.f32 %v252, %v253
    %v255 = vsel %vm164, %v220, 0.0
    %v256 = vadd.f32 %v254, %v255
    %v257 = vsel %vm164, %v221, 0.0
    %v258 = vadd.f32 %v256, %v257
    %v259 = vsel %vm164, %v222, 0.0
    %v260 = vadd.f32 %v258, %v259
    %v261 = vsel %vm164, %v223, 0.0
    %v262 = vadd.f32 %v260, %v261
    %v263 = vsel %vm164, %v224, 0.0
    %v264 = vadd.f32 %v262, %v263
    %v265 = vsel %vm164, %v225, 0.0
    %v266 = vadd.f32 %v264, %v265
    %v267 = vadd.f32 %v227, %v266
    %268 = vst.msk [vmem:[%s226] sm:$0xff] %vm164, %v267
    // Predicated region
    $region14: #{tpu_custom_call.1} parent=1 // pred_check
      %p269 = pneg %p76
    $region15: #{tpu_custom_call.1} parent=1 // pred_check_branch
      %271 = sbr.rel (%p269) target = $region17
    $region16: #{tpu_custom_call.1} parent=1 // pred_region
      %v272 = vld [vmem:[#allocation2] sm:$0xff]
      %v273 = vld [vmem:[#allocation2 + $0x8] sm:$0xff]
      %274 = vst.msk [vmem:[#allocation3] sm:$0xff] %vm164, %v272
      %275 = vst.msk [vmem:[#allocation3 + $0x8] sm:$0xff] %vm164, %v273
    $region17: #{tpu_custom_call.1} parent=1 // pred_fallthru
      _
    // Predicated region
    $region18: #{tpu_custom_call.1} parent=1 // pred_check
      _
    $region19: #{tpu_custom_call.1} parent=1 // pred_check_branch
      %277 = sbr.rel (0) target = $region21
    $region20: #{tpu_custom_call.1} parent=1 // pred_region
      %279 = vsyncadd [#allocation4], 0
      %s280 = sshll.u32 [#allocation3], 4
      %s281 = int_to_ptr.vmem [resolvable:$true] %s280
      %s282 = sshll.u32 %s2, 4
      %s283 = int_to_ptr.hbm [resolvable:$true] %s282
      %288 = dma.vmem_to_hbm [thread:$0]  %s281, 256, %s283, [#allocation4], 128, 128, 8
    $region21: #{tpu_custom_call.1} parent=1 // pred_fallthru
      _
    // Predicated region
    $region22: #{tpu_custom_call.1} parent=1 // pred_check
      _
    $region23: #{tpu_custom_call.1} parent=1 // pred_check_branch
      %290 = sbr.rel (0) target = $region25
    $region24: #{tpu_custom_call.1} parent=1 // pred_region
      %292 = dma.done [#allocation4], 256
    $region25: #{tpu_custom_call.1} parent=1 // pred_fallthru
      _
    %293 = vsyncpa [#allocation4], 1

</llo_original>
